<compile_context>
chip_gen: v5e
topology: v5e:2x2
jax: 0.10.0
libtpu: 0.0.40
codegen_flags: <defaults>
</compile_context>

<pallas_src>
import functools

import jax
import jax.numpy as jnp
from jax.experimental import pallas as pl
from jax.experimental.pallas import tpu as pltpu


def _round_up(v: int, m: int) -> int:
    return -(-v // m) * m


# layout: x is [N_pad, F+1] (node-major, features on lanes, last column = 1 for real nodes);
#         batch is [1, N_pad] int32 graph ids (-1 for padding nodes);
#         w is [F+1, TP] with w[F, t_col] = 1 so lane t_col of x@w is the per-node "1";
#         b is [1, TP]; output is [B_pad, TP] f32 (lane-dense), sliced by the wrapper.
def graph_predictor_kernel(x_ref, batch_ref, w_ref, b_ref, out_ref, acc_ref, *, t_col):
    g = pl.program_id(0)          # graph-tile axis ("parallel")
    n = pl.program_id(1)          # node-tile reduction axis ("arbitrary")

    @pl.when(n == 0)
    def _init():
        acc_ref[...] = jnp.zeros_like(acc_ref)

    TB, TP = acc_ref.shape
    TN = x_ref.shape[0]
    stream_dtype = x_ref.dtype

    # Project the node tile first (MXU, bf16 in / f32 accumulate): [TN, F+1] @ [F+1, TP].
    # Lane t_col of xw is exactly 1.0 per real node (ones column of x), giving counts below.
    xw = jnp.dot(x_ref[...], w_ref[...], preferred_element_type=jnp.float32)

    # One-hot graph membership for this graph-tile (VPU). Padding nodes carry id -1 -> no row.
    graph_ids = g * TB + jax.lax.broadcasted_iota(jnp.int32, (TB, TN), 0)
    onehot = (batch_ref[...] == graph_ids).astype(stream_dtype)          # [TB, TN]

    # Segment-sum on the MXU at bf16 rate (f32 accumulation in scratch):
    # lanes [0, T) accumulate per-graph sums of x@w, lane t_col the per-graph node count.
    acc_ref[...] += jnp.dot(onehot, xw.astype(stream_dtype),
                            preferred_element_type=jnp.float32)

    @pl.when(n == pl.num_programs(1) - 1)
    def _finalize():
        acc = acc_ref[...]
        lane = jax.lax.broadcasted_iota(jnp.int32, (1, TP), 1)
        counts = jnp.sum(jnp.where(lane == t_col, acc, 0.0), axis=1, keepdims=True)
        inv = pl.reciprocal(jnp.maximum(counts, 1.0), approx=True)       # EUP; empty graph -> 0
        out_ref[...] = acc * inv + b_ref[...]


def graph_predictor_forward(x, edge_index, batch, w, b, num_graphs,
                            *, tn=1024, tb=256, stream_dtype=jnp.bfloat16):
    """Pallas-backed GraphPredictor readout (segment-mean over `batch` + linear head).

    `edge_index` is unpacked per the reference forward but unused (the base class defines
    no message passing). Graph ids outside [0, num_graphs) are dropped; empty graphs yield
    bias-only outputs (intended semantics).
    """
    del edge_index
    N, F = x.shape
    T = w.shape[1]

    # ---- padded / tiled geometry --------------------------------------------------------
    t_col = T                           # lane carrying per-graph node counts
    TP = _round_up(T + 1, 128)          # lane-dense output width (unmasked vst, full MXU N)
    F_s = F + 1                         # extra ones-column feeds the count lane via the MXU

    tb = min(tb, _round_up(max(num_graphs, 1), 8))
    B_pad = _round_up(max(num_graphs, 1), tb)

    tn_full = _round_up(max(N, 1), 16)  # bf16 sublane packing
    tn = tn_full if tn >= tn_full else _round_up(tn, 128)
    N_pad = _round_up(max(N, 1), tn)

    # ---- padded operands ----------------------------------------------------------------
    x_p = jnp.zeros((N_pad, F_s), stream_dtype)
    x_p = x_p.at[:N, :F].set(x.astype(stream_dtype))
    x_p = x_p.at[:N, F].set(jnp.ones((N,), stream_dtype))                # ones column -> counts
    batch_p = jnp.full((1, N_pad), -1, jnp.int32).at[0, :N].set(batch.astype(jnp.int32))
    w_p = jnp.zeros((F_s, TP), stream_dtype)
    w_p = w_p.at[:F, :T].set(w.astype(stream_dtype))
    w_p = w_p.at[F, t_col].set(jnp.asarray(1, stream_dtype))
    b_p = jnp.zeros((1, TP), jnp.float32).at[0, :T].set(b.astype(jnp.float32))

    grid = (B_pad // tb, N_pad // tn)
    itemsize = jnp.dtype(stream_dtype).itemsize

    # Rough VMEM working-set estimate (lane-padded) -> scoped limit with headroom, capped so
    # it stays comfortably inside v7x's 64 MiB physical VMEM.
    est = (2 * tn * _round_up(F_s, 128) * itemsize        # x tile, double-buffered
           + 2 * 8 * _round_up(tn, 128) * 4               # batch-id tile
           + 2 * _round_up(F_s, 8) * TP * itemsize        # W (resident block, double-buffered)
           + 2 * 8 * TP * 4                               # bias
           + 2 * tb * TP * 4                              # output block
           + tb * TP * 4                                  # accumulator scratch
           + tn * TP * (4 + itemsize)                     # xw intermediate (f32 + bf16 copy)
           + tb * _round_up(tn, 128) * itemsize)          # one-hot intermediate
    vmem_limit = int(min(48 * 1024 * 1024, max(32 * 1024 * 1024, 2 * est)))

    gb, _ = grid
    cost = pl.CostEstimate(
        flops=2 * gb * N_pad * F_s * TP + 2 * B_pad * N_pad * TP,
        transcendentals=B_pad,
        bytes_accessed=gb * (N_pad * F_s * itemsize + N_pad * 4)
        + F_s * TP * itemsize + B_pad * TP * 4,
    )

    kernel = functools.partial(graph_predictor_kernel, t_col=t_col)
    out_pad = pl.pallas_call(
        kernel,
        out_shape=jax.ShapeDtypeStruct((B_pad, TP), jnp.float32),
        grid_spec=pltpu.PrefetchScalarGridSpec(
            num_scalar_prefetch=0,
            grid=grid,
            in_specs=[
                pl.BlockSpec((tn, F_s), lambda g, n: (n, 0)),   # x: streamed over node tiles
                pl.BlockSpec((1, tn), lambda g, n: (0, n)),     # batch ids
                pl.BlockSpec((F_s, TP), lambda g, n: (0, 0)),   # W (resident)
                pl.BlockSpec((1, TP), lambda g, n: (0, 0)),     # bias (resident)
            ],
            out_specs=pl.BlockSpec((tb, TP), lambda g, n: (g, 0)),
            scratch_shapes=[pltpu.VMEM((tb, TP), jnp.float32)],
        ),
        compiler_params=pltpu.CompilerParams(
            dimension_semantics=("parallel", "arbitrary"),
            vmem_limit_bytes=vmem_limit,
        ),
        cost_estimate=cost,
    )(x_p, batch_p, w_p, b_p)

    return out_pad[:num_graphs, :T]


if __name__ == "__main__":
    # Small deterministic problem consistent with the module's __init__ signature.
    dim_node_features = 32
    dim_edge_features = 4   # declared by the module; unused by this readout
    dim_target = 8
    num_nodes = 16
    num_edges = 24
    num_graphs = 2

    key = jax.random.PRNGKey(0)
    kx, ke, kw, kb = jax.random.split(key, 4)

    x = jax.random.normal(kx, (num_nodes, dim_node_features), dtype=jnp.float32)
    edge_index = jax.random.randint(ke, (2, num_edges), 0, num_nodes, dtype=jnp.int32)
    batch = jnp.concatenate(
        [jnp.zeros((8,), jnp.int32), jnp.ones((8,), jnp.int32)]
    )  # node -> graph id

    # Deterministic parameter init (shapes implied by dim_node_features -> dim_target).
    w = jax.random.normal(kw, (dim_node_features, dim_target), dtype=jnp.float32) * 0.1
    b = jax.random.normal(kb, (dim_target,), dtype=jnp.float32) * 0.1

    out = graph_predictor_forward(x, edge_index, batch, w, b, num_graphs)
    out = jax.block_until_ready(out)

    # Pure-JAX reference with the same bf16-streamed inputs (f32 math).
    xb = x.astype(jnp.bfloat16).astype(jnp.float32)
    wb = w.astype(jnp.bfloat16).astype(jnp.float32)
    onehot = (batch[None, :] == jnp.arange(num_graphs)[:, None]).astype(jnp.float32)
    mean_ref = (onehot @ xb) / jnp.maximum(onehot.sum(-1, keepdims=True), 1.0)
    ref = mean_ref @ wb + b[None, :]

    assert out.shape == (num_graphs, dim_target)
    # Tolerance covers bf16 streaming (both matmuls) + approx reciprocal + reassociation.
    assert jnp.allclose(out, ref, atol=2e-2, rtol=2e-2), float(jnp.max(jnp.abs(out - ref)))

    print("KERNEL_OK")
</pallas_src>

<mosaic_0001>
module attributes {stable_mosaic.version = 11 : i64} {
  func.func @graph_predictor_kernel(%arg0: i32, %arg1: i32, %arg2: memref<16x33xbf16, #tpu.memory_space<vmem>>, %arg3: memref<1x16xi32, #tpu.memory_space<vmem>>, %arg4: memref<33x128xbf16, #tpu.memory_space<vmem>>, %arg5: memref<1x128xf32, #tpu.memory_space<vmem>>, %arg6: memref<8x128xf32, #tpu.memory_space<vmem>>, %arg7: memref<8x128xf32, #tpu.memory_space<vmem>>) attributes {dimension_semantics = [#tpu.dimension_semantics<parallel>, #tpu.dimension_semantics<arbitrary>], iteration_bounds = array<i64: 1, 1>, scalar_prefetch = 0 : i64, scratch_operands = 1 : i64, tpu.core_type = #tpu.core_type<tc>, window_params = [{transform_indices = @transform_0, window_bounds = array<i64: 16, 33>}, {transform_indices = @transform_1, window_bounds = array<i64: 1, 16>}, {pipeline_mode = #tpu.pipeline_mode<synchronous>, transform_indices = @transform_2, window_bounds = array<i64: 33, 128>}, {pipeline_mode = #tpu.pipeline_mode<synchronous>, transform_indices = @transform_3, window_bounds = array<i64: 1, 128>}, {transform_indices = @transform_4, window_bounds = array<i64: 8, 128>}]} {
    %c0_i32 = arith.constant 0 : i32
    %0 = arith.cmpi eq, %arg1, %c0_i32 : i32
    %1 = arith.extui %0 : i1 to i32
    %c0_i32_0 = arith.constant 0 : i32
    %2 = arith.cmpi ne, %1, %c0_i32_0 : i32
    scf.if %2 {
      %cst_13 = arith.constant 0.000000e+00 : f32
      %24 = vector.broadcast %cst_13 : f32 to vector<8x128xf32>
      %c0_14 = arith.constant 0 : index
      %c0_15 = arith.constant 0 : index
      %25 = vector.load %arg7[%c0_14, %c0_15] : memref<8x128xf32, #tpu.memory_space<vmem>>, vector<8x128xf32>
      tpu.vector_store %arg7[%c0_14, %c0_15], %24 {strides = array<i32>} : memref<8x128xf32, #tpu.memory_space<vmem>>, vector<8x128xf32>,
    } else {
    }
    %c0 = arith.constant 0 : index
    %c0_1 = arith.constant 0 : index
    %3 = vector.load %arg2[%c0, %c0_1] : memref<16x33xbf16, #tpu.memory_space<vmem>>, vector<16x33xbf16>
    %c0_2 = arith.constant 0 : index
    %c0_3 = arith.constant 0 : index
    %4 = vector.load %arg4[%c0_2, %c0_3] : memref<33x128xbf16, #tpu.memory_space<vmem>>, vector<33x128xbf16>
    %cst = arith.constant dense<0.000000e+00> : vector<16x128xf32>
    %5 = tpu.matmul %3, %4, %cst {dimension_numbers = #tpu.dot_dimension_numbers<[1], [0], [0], [1], [0, 0, 1, 1], [], []>} : vector<16x33xbf16>, vector<33x128xbf16>, vector<16x128xf32> -> vector<16x128xf32>
    %c8_i32 = arith.constant 8 : i32
    %6 = arith.muli %arg0, %c8_i32 : i32
    %7 = tpu.iota {dimensions = array<i32: 0>} : vector<8x16xi32>
    %8 = vector.broadcast %6 : i32 to vector<8x16xi32>
    %9 = arith.addi %8, %7 : vector<8x16xi32>
    %c0_4 = arith.constant 0 : index
    %c0_5 = arith.constant 0 : index
    %10 = vector.load %arg3[%c0_4, %c0_5] : memref<1x16xi32, #tpu.memory_space<vmem>>, vector<1x16xi32>
    %11 = vector.broadcast %10 : vector<1x16xi32> to vector<8x16xi32>
    %12 = arith.cmpi eq, %11, %9 : vector<8x16xi32>
    %13 = arith.extui %12 : vector<8x16xi1> to vector<8x16xi32>
    %14 = arith.sitofp %13 : vector<8x16xi32> to vector<8x16xf32>
    %15 = arith.truncf %14 : vector<8x16xf32> to vector<8x16xbf16>
    %c0_6 = arith.constant 0 : index
    %c0_7 = arith.constant 0 : index
    %16 = vector.load %arg7[%c0_6, %c0_7] : memref<8x128xf32, #tpu.memory_space<vmem>>, vector<8x128xf32>
    %17 = arith.truncf %5 : vector<16x128xf32> to vector<16x128xbf16>
    %cst_8 = arith.constant dense<0.000000e+00> : vector<8x128xf32>
    %18 = tpu.matmul %15, %17, %cst_8 {dimension_numbers = #tpu.dot_dimension_numbers<[1], [0], [0], [1], [0, 0, 1, 1], [], []>} : vector<8x16xbf16>, vector<16x128xbf16>, vector<8x128xf32> -> vector<8x128xf32>
    %19 = arith.addf %16, %18 : vector<8x128xf32>
    %c0_9 = arith.constant 0 : index
    %c0_10 = arith.constant 0 : index
    %20 = vector.load %arg7[%c0_9, %c0_10] : memref<8x128xf32, #tpu.memory_space<vmem>>, vector<8x128xf32>
    tpu.vector_store %arg7[%c0_9, %c0_10], %19 {strides = array<i32>} : memref<8x128xf32, #tpu.memory_space<vmem>>, vector<8x128xf32>,
    %c0_i32_11 = arith.constant 0 : i32
    %21 = arith.cmpi eq, %arg1, %c0_i32_11 : i32
    %22 = arith.extui %21 : i1 to i32
    %c0_i32_12 = arith.constant 0 : i32
    %23 = arith.cmpi ne, %22, %c0_i32_12 : i32
    scf.if %23 {
      %c0_13 = arith.constant 0 : index
      %c0_14 = arith.constant 0 : index
      %24 = vector.load %arg7[%c0_13, %c0_14] : memref<8x128xf32, #tpu.memory_space<vmem>>, vector<8x128xf32>
      %25 = tpu.iota {dimensions = array<i32: 1>} : vector<1x128xi32>
      %c8_i32_15 = arith.constant 8 : i32
      %26 = vector.broadcast %c8_i32_15 : i32 to vector<1x128xi32>
      %27 = arith.cmpi eq, %25, %26 : vector<1x128xi32>
      %cst_16 = arith.constant 0.000000e+00 : f32
      %28 = vector.shape_cast %27 : vector<1x128xi1> to vector<1x128xi1>
      %29 = vector.broadcast %28 : vector<1x128xi1> to vector<8x128xi1>
      %30 = vector.broadcast %cst_16 : f32 to vector<8x128xf32>
      %31 = arith.select %29, %24, %30 : vector<8x128xi1>, vector<8x128xf32>
      %cst_17 = arith.constant dense<0.000000e+00> : vector<8xf32>
      %32 = vector.multi_reduction <add>, %31, %cst_17 [1] : vector<8x128xf32> to vector<8xf32>
      %33 = vector.shape_cast %32 : vector<8xf32> to vector<8x1xf32>
      %cst_18 = arith.constant 1.000000e+00 : f32
      %34 = vector.broadcast %cst_18 : f32 to vector<8x1xf32>
      %35 = arith.maximumf %33, %34 : vector<8x1xf32>
      %36 = tpu.reciprocal %35 {approx = true} : vector<8x1xf32> -> vector<8x1xf32>
      %37 = vector.broadcast %36 : vector<8x1xf32> to vector<8x128xf32>
      %38 = arith.mulf %24, %37 : vector<8x128xf32>
      %c0_19 = arith.constant 0 : index
      %c0_20 = arith.constant 0 : index
      %39 = vector.load %arg5[%c0_19, %c0_20] : memref<1x128xf32, #tpu.memory_space<vmem>>, vector<1x128xf32>
      %40 = vector.broadcast %39 : vector<1x128xf32> to vector<8x128xf32>
      %41 = arith.addf %38, %40 : vector<8x128xf32>
      %c0_21 = arith.constant 0 : index
      %c0_22 = arith.constant 0 : index
      %42 = vector.load %arg6[%c0_21, %c0_22] : memref<8x128xf32, #tpu.memory_space<vmem>>, vector<8x128xf32>
      tpu.vector_store %arg6[%c0_21, %c0_22], %41 {strides = array<i32>} : memref<8x128xf32, #tpu.memory_space<vmem>>, vector<8x128xf32>,
    } else {
    }
    return
  }
  func.func @transform_0(%arg0: i32, %arg1: i32) -> (i32, i32) {
    %c0_i32 = arith.constant 0 : i32
    %c0_i32_0 = arith.constant 0 : i32
    return %arg1, %c0_i32 : i32, i32
  }
  func.func @transform_1(%arg0: i32, %arg1: i32) -> (i32, i32) {
    %c0_i32 = arith.constant 0 : i32
    %c0_i32_0 = arith.constant 0 : i32
    return %c0_i32, %arg1 : i32, i32
  }
  func.func @transform_2(%arg0: i32, %arg1: i32) -> (i32, i32) {
    %c0_i32 = arith.constant 0 : i32
    %c0_i32_0 = arith.constant 0 : i32
    %c0_i32_1 = arith.constant 0 : i32
    return %c0_i32, %c0_i32_0 : i32, i32
  }
  func.func @transform_3(%arg0: i32, %arg1: i32) -> (i32, i32) {
    %c0_i32 = arith.constant 0 : i32
    %c0_i32_0 = arith.constant 0 : i32
    %c0_i32_1 = arith.constant 0 : i32
    return %c0_i32, %c0_i32_0 : i32, i32
  }
  func.func @transform_4(%arg0: i32, %arg1: i32) -> (i32, i32) {
    %c0_i32 = arith.constant 0 : i32
    %c0_i32_0 = arith.constant 0 : i32
    return %arg0, %c0_i32 : i32, i32
  }
}

</mosaic_0001>

<llo_original>
// kernel: tpu_custom_call.1
$region0: #{tpu_custom_call.1}
  #allocation0 [shape = 'u32[]', space=smem, size = 0x4, offset = 0x4, fixed_abs, tag = 'smem constant byte address 0x4 - core index']
  #allocation1 [shape = 'u32[72,128]{1,0:T(1,128)}', space=vmem, size = 0x9000, scoped, tag = 'internal scratch']
  #allocation2 [shape = 'f32[8,128]{1,0:T(8,128)}', space=vmem, size = 0x1000, scoped, tag = 'scratch operand']
  %s0 = inlined_call_operand.hbm [shape: bf16[16,33], index: 0, kind: input, shape index: {}]
  %s1 = inlined_call_operand.hbm [shape: s32[1,16], index: 1, kind: input, shape index: {}]
  %s2 = inlined_call_operand.hbm [shape: bf16[33,128], index: 2, kind: input, shape index: {}]
  %s3 = inlined_call_operand.vmem [shape: f32[1,128], index: 3, kind: input, shape index: {}]
  %s4 = inlined_call_operand.hbm [shape: f32[8,128], index: 4, kind: output, shape index: {}]
  %s5 = sld [smem:[#allocation0]]
  $region46: #{tpu_custom_call.1} parent=0
    _
  %s7 = ssub.s32 1, %s5
  %s8 = scalar_select 0, %s7, %s5
  $region1: #{tpu_custom_call.1} parent=0
    #allocation3 [shape = 'u8[4096]{0}', space=vmem, size = 0x1000, scoped, tag = 'input window, operand 0, single buffered']
    #allocation4 [shape = 's32[1]{0}', space=sflag, size = 0x4, scoped, tag = 'scoped memory for tpu_custom_call.1']
    #allocation5 [shape = 's32[1]{0}', space=sflag, size = 0x4, scoped, tag = 'scoped memory for tpu_custom_call.1']
    #allocation6 [shape = 'u8[512]{0}', space=vmem, size = 0x400, scoped, tag = 'input window, operand 1, single buffered']
    #allocation7 [shape = 's32[1]{0}', space=sflag, size = 0x4, scoped, tag = 'scoped memory for tpu_custom_call.1']
    #allocation8 [shape = 'u8[10240]{0}', space=vmem, size = 0x2800, scoped, tag = 'input window, operand 2, single buffered']
    #allocation9 [shape = 'u8[4096]{0}', space=vmem, size = 0x1000, scoped, tag = 'output window, operand 0, single buffered']
    %9 = vsyncpa [#allocation4], 0
    %10 = vsyncpa [#allocation7], 0
    %11 = vsyncpa [#allocation5], 0
    // Predicated region
    $region2: #{tpu_custom_call.1} parent=1 // pred_check
      _
    $region3: #{tpu_custom_call.1} parent=1 // pred_check_branch
      %13 = sbr.rel (0) target = $region5
    $region4: #{tpu_custom_call.1} parent=1 // pred_region
      %15 = vsyncadd [#allocation4], 0
      %s16 = sshll.u32 %s0, 4
      %s17 = int_to_ptr.hbm [resolvable:$true] %s16
      %s18 = sshll.u32 [#allocation3], 4
      %s19 = int_to_ptr.vmem [resolvable:$true] %s18
      %24 = dma.hbm_to_vmem [thread:$0]  %s17, 128, %s19, [#allocation4], 64, 64, 4
    $region5: #{tpu_custom_call.1} parent=1 // pred_fallthru
      _
    // Predicated region
    $region6: #{tpu_custom_call.1} parent=1 // pred_check
      _
    $region7: #{tpu_custom_call.1} parent=1 // pred_check_branch
      %26 = sbr.rel (0) target = $region9
    $region8: #{tpu_custom_call.1} parent=1 // pred_region
      %28 = vsyncadd [#allocation7], 0
      %s30 = sshll.u32 %s1, 4
      %s31 = int_to_ptr.hbm [resolvable:$true] %s30
      %s32 = sshll.u32 [#allocation6], 4
      %s33 = int_to_ptr.vmem [resolvable:$true] %s32
      %35 = dma.hbm_to_vmem [thread:$0]  %s31, 16, %s33, [#allocation7]
    $region9: #{tpu_custom_call.1} parent=1 // pred_fallthru
      _
    // Predicated region
    $region10: #{tpu_custom_call.1} parent=1 // pred_check
      _
    $region11: #{tpu_custom_call.1} parent=1 // pred_check_branch
      %37 = sbr.rel (0) target = $region13
    $region12: #{tpu_custom_call.1} parent=1 // pred_region
      %39 = vsyncadd [#allocation7], 0
      %s40 = sshll.u32 %s2, 4
      %s41 = int_to_ptr.hbm [resolvable:$true] %s40
      %s42 = sshll.u32 [#allocation8], 4
      %s43 = int_to_ptr.vmem [resolvable:$true] %s42
      %48 = dma.hbm_to_vmem [thread:$0]  %s41, 320, %s43, [#allocation7], 64, 64, 4
    $region13: #{tpu_custom_call.1} parent=1 // pred_fallthru
      _
    // Predicated region
    $region14: #{tpu_custom_call.1} parent=1 // pred_check
      _
    $region15: #{tpu_custom_call.1} parent=1 // pred_check_branch
      %50 = sbr.rel (0) target = $region17
    $region16: #{tpu_custom_call.1} parent=1 // pred_region
      _
    $region17: #{tpu_custom_call.1} parent=1 // pred_fallthru
      _
    // Predicated region
    $region18: #{tpu_custom_call.1} parent=1 // pred_check
      _
    $region19: #{tpu_custom_call.1} parent=1 // pred_check_branch
      %52 = sbr.rel (0) target = $region21
    $region20: #{tpu_custom_call.1} parent=1 // pred_region
      %54 = dma.done [#allocation4], 128
    $region21: #{tpu_custom_call.1} parent=1 // pred_fallthru
      _
    // Predicated region
    $region22: #{tpu_custom_call.1} parent=1 // pred_check
      _
    $region23: #{tpu_custom_call.1} parent=1 // pred_check_branch
      %56 = sbr.rel (0) target = $region25
    $region24: #{tpu_custom_call.1} parent=1 // pred_region
      %58 = dma.done [#allocation7], 16
    $region25: #{tpu_custom_call.1} parent=1 // pred_fallthru
      _
    // Predicated region
    $region26: #{tpu_custom_call.1} parent=1 // pred_check
      _
    $region27: #{tpu_custom_call.1} parent=1 // pred_check_branch
      %60 = sbr.rel (0) target = $region29
    $region28: #{tpu_custom_call.1} parent=1 // pred_region
      %62 = dma.done [#allocation7], 320
    $region29: #{tpu_custom_call.1} parent=1 // pred_fallthru
      _
    %p64 = scmp.eq.s32.totalorder 0, 0
    // Predicated region
    $region30: #{tpu_custom_call.1} parent=1 // pred_check
      %p65 = pneg %p64
    $region31: #{tpu_custom_call.1} parent=1 // pred_check_branch
      %67 = sbr.rel (%p65) target = $region33
    $region32: #{tpu_custom_call.1} parent=1 // pred_region
      %68 = vst [vmem:[#allocation2] sm:$0xff] 0.0
    $region33: #{tpu_custom_call.1} parent=1 // pred_fallthru
      _
    %v69 = vld [vmem:[#allocation3] sm:$0xf]
    %v70 = vld [vmem:[#allocation3 + $0x4] sm:$0xf]
    %v71 = vld [vmem:[#allocation8] sm:$0xf]
    %v72 = vld [vmem:[#allocation8 + $0x4] sm:$0xf]
    %v73 = vld [vmem:[#allocation8 + $0x8] sm:$0xf]
    %v74 = vld [vmem:[#allocation8 + $0xc] sm:$0xf]
    %v75 = vld [vmem:[#allocation8 + $0x10] sm:$0x1]
    %v78 = vunpack.c.l.b16 %v69
    %v79 = vunpack.c.l.b16 %v70
    %v80 = vpack.c.b16 %v79, %v78
    %v86 = vunpack.c.l.b16 %v71
    %v87 = vunpack.c.l.b16 %v72
    %v88 = vunpack.c.l.b16 %v73
    %v89 = vunpack.c.l.b16 %v74
    %v90 = vunpack.c.l.b16 %v75
    %v91 = vpack.c.b16 %v87, %v86
    %v92 = vpack.c.b16 %v89, %v88
    %v93 = vpack.c.b16 %v90, %v90
    %vm96 = vcmask 269312
    %v98 = vsel %vm96, %v80, 0
    %vm100 = vcmask 1040384
    %v101 = vsel 0, 4294967295, 65535
    %v102 = vsel %vm100, %v101, 0
    %v104 = vand.u32 %v93, %v102
    %106 = vmatpush.bf16.msra.mxu0 0
    %107 = vmatpush.bf16.msra.mxu0 0
    %108 = vmatpush.bf16.msra.mxu0 0
    %109 = vmatpush.bf16.msra.mxu0 0
    %110 = vmatpush.bf16.msra.mxu0 0
    %111 = vmatpush.bf16.msra.mxu0 %v104
    %112 = vmatpush.bf16.msra.mxu0 %v92
    %113 = vmatpush.bf16.msra.mxu0 %v91
    %114 = vmatmul.bf16.gmra.mxu0 %v98
    %v115 = vpop.f32.mrf.mxu0
    %v116 = vadd.f32 0.0, %v115
    %v117 = vpop.f32.mrf.mxu0
    %v118 = vadd.f32 0.0, %v117
    %119 = vdwg.mxu0
    %s120 = smul.u32 0, 8
    %v121 = vlaneseq
    %v122 = vshrl.u32 %v121, 7
    %v123 = vstv %s120
    %v124 = vadd.s32 %v123, %v122
    %v125 = vld [vmem:[#allocation6] sm:$0x1]
    %v126 = vperm.slane %v125, 0
    %vm127 = vcmp.eq.s32.totalorder %v126, %v124
    %v128 = vsel %vm127, 1, 0
    %v129 = vcvt.s32.f32 %v128
    %v130 = vpack.c.bf16 %v129, %v129
    %v131 = vld [vmem:[#allocation2] sm:$0xff]
    %v132 = vpack.c.bf16 %v118, %v116
    %vm133 = vcmask 130048
    %v135 = vsel %vm133, %v130, 0
    %137 = vmatpush.bf16.msra.mxu0 0
    %138 = vmatpush.bf16.msra.mxu0 0
    %139 = vmatpush.bf16.msra.mxu0 0
    %140 = vmatpush.bf16.msra.mxu0 0
    %141 = vmatpush.bf16.msra.mxu0 0
    %142 = vmatpush.bf16.msra.mxu0 0
    %143 = vmatpush.bf16.msra.mxu0 0
    %144 = vmatpush.bf16.msra.mxu0 %v132
    %145 = vmatmul.bf16.gmra.mxu0 %v135
    %v146 = vpop.f32.mrf.mxu0
    %v147 = vadd.f32 0.0, %v146
    %v148 = vpop.f32.mrf.mxu0
    %149 = vdwg.mxu0
    %v150 = vadd.f32 %v131, %v147
    %151 = vst [vmem:[#allocation2] sm:$0xff] %v150
    // Predicated region
    $region34: #{tpu_custom_call.1} parent=1 // pred_check
      %p152 = pneg %p64
    $region35: #{tpu_custom_call.1} parent=1 // pred_check_branch
      %154 = sbr.rel (%p152) target = $region37
    $region36: #{tpu_custom_call.1} parent=1 // pred_region
      %v155 = vld [vmem:[#allocation2] sm:$0xff]
      %v156 = vlaneseq
      %v157 = vand.u32 %v156, 127
      %vm158 = vcmp.eq.s32.totalorder %v157, 8
      %v159 = vsel %vm158, 1, 0
      %vm160 = vcmp.eq.s32.totalorder %v159, 1
      %v161 = vsel %vm160, %v155, 0.0
      %162 = vadd.xlane.f32.xlu0 %v161
      %v163 = vpop.xlane.xlu0 %162
      %v164 = vmax.f32 %v163, 1.0
      %v165 = vrcp.pop %v164
      %v166 = vmul.f32 %v155, %v165
      %v167 = vld [vmem:[%s3] sm:$0x1]
      %v169 = vperm.slane %v167, 0
      %v171 = vadd.f32 %v166, %v169
      %172 = vst [vmem:[#allocation9] sm:$0xff] %v171
    $region37: #{tpu_custom_call.1} parent=1 // pred_fallthru
      _
    // Predicated region
    $region38: #{tpu_custom_call.1} parent=1 // pred_check
      _
    $region39: #{tpu_custom_call.1} parent=1 // pred_check_branch
      %174 = sbr.rel (0) target = $region41
    $region40: #{tpu_custom_call.1} parent=1 // pred_region
      %176 = vsyncadd [#allocation5], 0
      %s178 = sshll.u32 [#allocation9], 4
      %s179 = int_to_ptr.vmem [resolvable:$true] %s178
      %s180 = sshll.u32 %s4, 4
      %s181 = int_to_ptr.hbm [resolvable:$true] %s180
      %183 = dma.vmem_to_hbm [thread:$0]  %s179, 128, %s181, [#allocation5]
    $region41: #{tpu_custom_call.1} parent=1 // pred_fallthru
      _
    // Predicated region
    $region42: #{tpu_custom_call.1} parent=1 // pred_check
      _
    $region43: #{tpu_custom_call.1} parent=1 // pred_check_branch
      %185 = sbr.rel (0) target = $region45
    $region44: #{tpu_custom_call.1} parent=1 // pred_region
      %187 = dma.done [#allocation5], 128
    $region45: #{tpu_custom_call.1} parent=1 // pred_fallthru
      _
    %188 = vsyncpa [#allocation4], 1
    %189 = vsyncpa [#allocation7], 1
    %190 = vsyncpa [#allocation5], 1

</llo_original>
